<compile_context>
chip_gen: v6e
topology: v6e:2x2x1
jax: 0.10.0
libtpu: 0.0.40
codegen_flags: <defaults>
</compile_context>

<pallas_src>
import jax
import jax.numpy as jnp
from jax.experimental import pallas as pl
from jax.experimental.pallas import tpu as pltpu


def _seg_head_kernel(x_ref, w_ref, b_ref, o_ref):
    # x_ref : (TR, K)   tile of (possibly lane-packed) input features
    # w_ref : (K,  M)   full (possibly block-diagonal) weight, resident
    # b_ref : (1,  M)   bias row (f32)
    # o_ref : (TR, M)   output tile
    acc = jnp.dot(x_ref[...], w_ref[...], preferred_element_type=jnp.float32)
    o_ref[...] = (acc + b_ref[...]).astype(o_ref.dtype)


def _round_up(v, m):
    return ((v + m - 1) // m) * m


def _choose_tile_rows(rows, target_rows, row_bytes,
                      vmem_budget_bytes=8 * 1024 * 1024):
    """Row-tile: multiple of 8 sublanes, >=2 grid steps when possible, VMEM-capped."""
    if rows <= 8:
        return 8
    # Keep at least 2 grid steps so a "parallel" axis can shard across the two
    # v7x TensorCores instead of collapsing to one giant tile.
    tile = min(max(8, target_rows), _round_up(pl.cdiv(rows, 2), 8))
    max_by_vmem = max(8, ((vmem_budget_bytes // max(row_bytes, 1)) // 8) * 8)
    tile = min(tile, max_by_vmem)
    return max(8, (tile // 8) * 8)


def precompute_seg_head_params(weight, bias, *, param_dtype=None):
    """Pack nn.Linear params once (per model, not per forward).

    weight: (num_classes, C_in)  — torch.nn.Linear layout
    bias  : (num_classes,)
    """
    num_classes, c_in = weight.shape
    if param_dtype is None:
        param_dtype = weight.dtype
    lane_dense = 0 < num_classes <= 128 and 128 % num_classes == 0
    if lane_dense:
        group = 128 // num_classes
        # Block-diagonal weight: block (j, j) = W.T, zeros elsewhere.
        w = jnp.kron(jnp.eye(group, dtype=jnp.float32),
                     weight.T.astype(jnp.float32)).astype(param_dtype)
        b = jnp.tile(bias.astype(jnp.float32), group).reshape(1, group * num_classes)
    else:
        group = 1
        w = weight.T.astype(param_dtype)
        b = bias.astype(jnp.float32).reshape(1, num_classes)
    return {
        "mode": "lane_dense" if lane_dense else "direct",
        "group": group,
        "c_in": c_in,
        "num_classes": num_classes,
        "w": w,
        "b": b,
    }


_COMPILER_PARAMS = pltpu.CompilerParams(
    dimension_semantics=("parallel",),      # megacore-shardable grid axis
    vmem_limit_bytes=32 * 1024 * 1024,      # safe on v5e/v6e/v7x
)


def seg_head_forward(x, params, *, tile_points=8192, out_dtype=None):
    """x: (N, C_in) point features. Returns (N, num_classes) logits."""
    n, c_in = x.shape
    assert c_in == params["c_in"], "feature dim mismatch"
    num_classes = params["num_classes"]
    group = params["group"]
    w, b = params["w"], params["b"]
    if out_dtype is None:
        out_dtype = x.dtype               # optional bf16 output is flag-gated
    in_itemsize = jnp.dtype(x.dtype).itemsize
    out_itemsize = jnp.dtype(out_dtype).itemsize

    if params["mode"] == "lane_dense":
        lanes = group * num_classes        # == 128
        k_dim = group * c_in
        # Pad only to a multiple of `group` (and >= 8 packed rows); for typical
        # N this is a no-op, so x is NOT copied through HBM.
        rows = max(pl.cdiv(n, group), 8)
        n_packed = rows * group
        x_p = x if n_packed == n else jnp.pad(x, ((0, n_packed - n), (0, 0)))
        x_ld = x_p.reshape(rows, k_dim)    # metadata-only row-major reshape

        tile_rows = _choose_tile_rows(rows, max(8, tile_points // group),
                                      k_dim * in_itemsize)
        grid = (pl.cdiv(rows, tile_rows),)  # ragged final block masked by Pallas

        flops = 2 * rows * k_dim * lanes
        bytes_accessed = (x_ld.size * in_itemsize
                          + w.size * jnp.dtype(w.dtype).itemsize
                          + b.size * 4
                          + rows * lanes * out_itemsize)

        out_ld = pl.pallas_call(
            _seg_head_kernel,
            out_shape=jax.ShapeDtypeStruct((rows, lanes), out_dtype),
            grid_spec=pltpu.PrefetchScalarGridSpec(
                num_scalar_prefetch=0,
                grid=grid,
                in_specs=[
                    pl.BlockSpec((tile_rows, k_dim), lambda i: (i, 0)),
                    pl.BlockSpec((k_dim, lanes), lambda i: (0, 0)),
                    pl.BlockSpec((1, lanes), lambda i: (0, 0)),
                ],
                out_specs=pl.BlockSpec((tile_rows, lanes), lambda i: (i, 0)),
            ),
            compiler_params=_COMPILER_PARAMS,
            cost_estimate=pl.CostEstimate(
                flops=flops, transcendentals=0, bytes_accessed=bytes_accessed),
        )(x_ld, w, b)

        out = out_ld.reshape(n_packed, num_classes)   # metadata-only
        return out if n_packed == n else out[:n]

    # Fallback: direct (tile_rows, num_classes) output (masked lane stores,
    # correct for any num_classes that does not divide 128).
    rows = n
    x_p = x
    if rows < 8:
        x_p = jnp.pad(x, ((0, 8 - rows), (0, 0)))
        rows = 8
    tile_rows = _choose_tile_rows(rows, tile_points, c_in * in_itemsize)
    grid = (pl.cdiv(rows, tile_rows),)

    flops = 2 * rows * c_in * num_classes
    bytes_accessed = (rows * c_in * in_itemsize
                      + w.size * jnp.dtype(w.dtype).itemsize
                      + b.size * 4
                      + rows * num_classes * out_itemsize)

    out = pl.pallas_call(
        _seg_head_kernel,
        out_shape=jax.ShapeDtypeStruct((rows, num_classes), out_dtype),
        grid_spec=pltpu.PrefetchScalarGridSpec(
            num_scalar_prefetch=0,
            grid=grid,
            in_specs=[
                pl.BlockSpec((tile_rows, c_in), lambda i: (i, 0)),
                pl.BlockSpec((c_in, num_classes), lambda i: (0, 0)),
                pl.BlockSpec((1, num_classes), lambda i: (0, 0)),
            ],
            out_specs=pl.BlockSpec((tile_rows, num_classes), lambda i: (i, 0)),
        ),
        compiler_params=_COMPILER_PARAMS,
        cost_estimate=pl.CostEstimate(
            flops=flops, transcendentals=0, bytes_accessed=bytes_accessed),
    )(x_p, w, b)
    return out[:n]


if __name__ == "__main__":
    # Shapes consistent with the module's forward: (N, backbone_out_channels).
    N = 2000
    backbone_out_channels = 32
    num_classes = 16

    key = jax.random.PRNGKey(0)
    kx, kw, kb = jax.random.split(key, 3)

    x = jax.random.normal(kx, (N, backbone_out_channels), dtype=jnp.float32)
    # torch.nn.Linear: weight (out_features, in_features), bias (out_features,)
    weight = 0.1 * jax.random.normal(
        kw, (num_classes, backbone_out_channels), dtype=jnp.float32)
    bias = 0.1 * jax.random.normal(kb, (num_classes,), dtype=jnp.float32)

    ref = jnp.dot(x, weight.T, precision=jax.lax.Precision.HIGHEST) + bias

    # f32 path: parameters packed once, reused every forward (no per-call prep).
    params_f32 = precompute_seg_head_params(weight, bias)
    out_f32 = jax.block_until_ready(seg_head_forward(x, params_f32))
    assert out_f32.shape == (N, num_classes)
    assert jnp.allclose(out_f32, ref, atol=1e-4, rtol=1e-4)

    # Ragged small-N case (N not a multiple of group=8) exercises the tail path.
    n_small = 37
    out_small = jax.block_until_ready(seg_head_forward(x[:n_small], params_f32))
    assert out_small.shape == (n_small, num_classes)
    assert jnp.allclose(out_small, ref[:n_small], atol=1e-4, rtol=1e-4)

    # bf16 fast path only when x already arrives as bf16 (no wrapper-side cast);
    # flagged precision change, looser tolerance.
    x_bf16 = x.astype(jnp.bfloat16)
    params_bf16 = precompute_seg_head_params(weight, bias, param_dtype=jnp.bfloat16)
    out_bf16 = jax.block_until_ready(seg_head_forward(x_bf16, params_bf16))
    assert out_bf16.shape == (N, num_classes)
    assert jnp.allclose(out_bf16.astype(jnp.float32), ref, atol=5e-2, rtol=5e-2)

    print("KERNEL_OK")
</pallas_src>

<mosaic_0001>
module attributes {stable_mosaic.version = 11 : i64} {
  func.func @_seg_head_kernel(%arg0: i32, %arg1: memref<128x256xf32, #tpu.memory_space<vmem>>, %arg2: memref<256x128xf32, #tpu.memory_space<vmem>>, %arg3: memref<1x128xf32, #tpu.memory_space<vmem>>, %arg4: memref<128x128xf32, #tpu.memory_space<vmem>>) attributes {dimension_semantics = [#tpu.dimension_semantics<parallel>], iteration_bounds = array<i64: 2>, scalar_prefetch = 0 : i64, scratch_operands = 0 : i64, tpu.core_type = #tpu.core_type<tc>, window_params = [{transform_indices = @transform_0, window_bounds = array<i64: 128, 256>}, {pipeline_mode = #tpu.pipeline_mode<synchronous>, transform_indices = @transform_1, window_bounds = array<i64: 256, 128>}, {pipeline_mode = #tpu.pipeline_mode<synchronous>, transform_indices = @transform_2, window_bounds = array<i64: 1, 128>}, {transform_indices = @transform_3, window_bounds = array<i64: 128, 128>}]} {
    %c0 = arith.constant 0 : index
    %c0_0 = arith.constant 0 : index
    %0 = vector.load %arg1[%c0, %c0_0] : memref<128x256xf32, #tpu.memory_space<vmem>>, vector<128x256xf32>
    %c0_1 = arith.constant 0 : index
    %c0_2 = arith.constant 0 : index
    %1 = vector.load %arg2[%c0_1, %c0_2] : memref<256x128xf32, #tpu.memory_space<vmem>>, vector<256x128xf32>
    %cst = arith.constant dense<0.000000e+00> : vector<128x128xf32>
    %2 = tpu.matmul %0, %1, %cst {dimension_numbers = #tpu.dot_dimension_numbers<[1], [0], [0], [1], [0, 0, 1, 1], [], []>} : vector<128x256xf32>, vector<256x128xf32>, vector<128x128xf32> -> vector<128x128xf32>
    %c0_3 = arith.constant 0 : index
    %c0_4 = arith.constant 0 : index
    %3 = vector.load %arg3[%c0_3, %c0_4] : memref<1x128xf32, #tpu.memory_space<vmem>>, vector<1x128xf32>
    %4 = vector.broadcast %3 : vector<1x128xf32> to vector<128x128xf32>
    %5 = arith.addf %2, %4 : vector<128x128xf32>
    %c0_5 = arith.constant 0 : index
    %c0_6 = arith.constant 0 : index
    %6 = vector.load %arg4[%c0_5, %c0_6] : memref<128x128xf32, #tpu.memory_space<vmem>>, vector<128x128xf32>
    tpu.vector_store %arg4[%c0_5, %c0_6], %5 {strides = array<i32>} : memref<128x128xf32, #tpu.memory_space<vmem>>, vector<128x128xf32>,
    return
  }
  func.func @transform_0(%arg0: i32) -> (i32, i32) {
    %c0_i32 = arith.constant 0 : i32
    %c0_i32_0 = arith.constant 0 : i32
    return %arg0, %c0_i32 : i32, i32
  }
  func.func @transform_1(%arg0: i32) -> (i32, i32) {
    %c0_i32 = arith.constant 0 : i32
    %c0_i32_0 = arith.constant 0 : i32
    %c0_i32_1 = arith.constant 0 : i32
    return %c0_i32, %c0_i32_0 : i32, i32
  }
  func.func @transform_2(%arg0: i32) -> (i32, i32) {
    %c0_i32 = arith.constant 0 : i32
    %c0_i32_0 = arith.constant 0 : i32
    %c0_i32_1 = arith.constant 0 : i32
    return %c0_i32, %c0_i32_0 : i32, i32
  }
  func.func @transform_3(%arg0: i32) -> (i32, i32) {
    %c0_i32 = arith.constant 0 : i32
    %c0_i32_0 = arith.constant 0 : i32
    return %arg0, %c0_i32 : i32, i32
  }
}

</mosaic_0001>

<llo_original>
// kernel: tpu_custom_call.1
$region0: #{tpu_custom_call.1}
  #allocation0 [shape = 'u32[]', space=smem, size = 0x4, offset = 0x4, fixed_abs, tag = 'smem constant byte address 0x4 - core index']
  #allocation1 [shape = 'u32[144,128]{1,0:T(1,128)}', space=vmem, size = 0x12000, scoped, tag = 'internal scratch']
  %s0 = inlined_call_operand.hbm [shape: f32[250,256], index: 0, kind: input, shape index: {}]
  %s1 = inlined_call_operand.hbm [shape: f32[256,128], index: 1, kind: input, shape index: {}]
  %s2 = inlined_call_operand.vmem [shape: f32[1,128], index: 2, kind: input, shape index: {}]
  %s3 = inlined_call_operand.hbm [shape: f32[250,128], index: 3, kind: output, shape index: {}]
  %s4 = sld [smem:[#allocation0]]
  $region53: #{tpu_custom_call.1} parent=0
    _
  %s6 = ssub.s32 1, %s4
  %s7 = scalar_select 0, %s6, %s4
  $region1: #{tpu_custom_call.1} parent=0
    #allocation2 [shape = 'u8[262144]{0}', space=vmem, size = 0x40000, scoped, tag = 'input window, operand 0']
    #allocation3 [shape = 's32[2]{0}', space=sflag, size = 0x8, scoped, tag = 'scoped memory for tpu_custom_call.1']
    #allocation4 [shape = 's32[2]{0}', space=sflag, size = 0x8, scoped, tag = 'scoped memory for tpu_custom_call.1']
    #allocation5 [shape = 'u8[131072]{0}', space=vmem, size = 0x20000, scoped, tag = 'input window, operand 1, single buffered']
    #allocation6 [shape = 's32[1]{0}', space=sflag, size = 0x4, scoped, tag = 'scoped memory for tpu_custom_call.1']
    #allocation7 [shape = 'u8[131072]{0}', space=vmem, size = 0x20000, scoped, tag = 'output window, operand 0']
    %8 = vsyncpa [#allocation3], 0
    %s9 = scalar_lea.sflag [#allocation3], 1
    %10 = vsyncpa %s9, 0
    %11 = vsyncpa [#allocation6], 0
    %12 = vsyncpa [#allocation4], 0
    %s13 = scalar_lea.sflag [#allocation4], 1
    %14 = vsyncpa %s13, 0
    loop: start=0, step=1, limit=4
    $region2: #{tpu_custom_call.1} parent=1 // loop_pre_header
      _
    $region3: #{tpu_custom_call.1} parent=1 // loop_header
      %s16 = sphi 0, %s20
      %p17 = scmp.ge.s32.totalorder %s16, 4
      %s26 = sphi 0, %s28
      %s29 = sphi 0, %s26
      %s30 = sphi 0, %s29
      %s46 = sphi 0, %s30
      %s50 = sphi 0, %s50
      %s52 = sphi 0, %s50
      %s53 = sphi 0, %s52
      %s67 = sphi 0, %s53
      %s71 = sphi 0, %s71
      %s73 = sphi 0, %s71
      %s74 = sphi 0, %s73
      %s88 = sphi 0, %s74
      %s94 = sphi 0, %s96
      %s97 = sphi 0, %s94
      %s98 = sphi 0, %s97
      %s114 = sphi 0, %s98
    $region4: #{tpu_custom_call.1} parent=1 // loop_header_branch
      %19 = sbr.rel (%p17) target = $region8
    $region5: #{tpu_custom_call.1} parent=1 // loop_body
      %s21 = ssub.s32 %s16, 1
      %s22 = ssub.s32 %s16, 2
      %s23 = sadd.s32 %s16, 1
      %s24 = ssub.s32 %s16, %s23
      %p25 = scmp.eq.s32.totalorder %s24, 0
      %s27 = sadd.s32 %s26, 1
      %s28 = scalar_select %p25, %s26, %s27
      %p31 = pneg %p25
      %p32 = scmp.eq.s32.totalorder %s16, 1
      %p33 = por %p31, %p32
      %p34 = scmp.ne.s32.totalorder %s26, %s29
      %p35 = scmp.eq.s32.totalorder %s16, 0
      %p36 = por %p34, %p35
      %p37 = scmp.ne.s32.totalorder %s26, %s29
      %p38 = scmp.eq.s32.totalorder %s21, 1
      %p39 = por %p37, %p38
      %p40 = scmp.ne.s32.totalorder %s29, %s30
      %p41 = scmp.eq.s32.totalorder %s21, 0
      %p42 = por %p40, %p41
      %p43 = scmp.ne.s32.totalorder %s29, %s30
      %p44 = scmp.eq.s32.totalorder %s22, 1
      %p45 = por %p43, %p44
      %p47 = scmp.ne.s32.totalorder %s30, %s46
      %p48 = scmp.eq.s32.totalorder %s22, 0
      %p49 = por %p47, %p48
      %s51 = sadd.s32 %s50, 1
      %p54 = scmp.eq.s32.totalorder %s16, 1
      %p55 = scmp.ne.s32.totalorder %s50, %s52
      %p56 = scmp.eq.s32.totalorder %s16, 0
      %p57 = por %p55, %p56
      %p58 = scmp.ne.s32.totalorder %s50, %s52
      %p59 = scmp.eq.s32.totalorder %s21, 1
      %p60 = por %p58, %p59
      %p61 = scmp.ne.s32.totalorder %s52, %s53
      %p62 = scmp.eq.s32.totalorder %s21, 0
      %p63 = por %p61, %p62
      %p64 = scmp.ne.s32.totalorder %s52, %s53
      %p65 = scmp.eq.s32.totalorder %s22, 1
      %p66 = por %p64, %p65
      %p68 = scmp.ne.s32.totalorder %s53, %s67
      %p69 = scmp.eq.s32.totalorder %s22, 0
      %p70 = por %p68, %p69
      %s72 = sadd.s32 %s71, 1
      %p75 = scmp.eq.s32.totalorder %s16, 1
      %p76 = scmp.ne.s32.totalorder %s71, %s73
      %p77 = scmp.eq.s32.totalorder %s16, 0
      %p78 = por %p76, %p77
      %p79 = scmp.ne.s32.totalorder %s71, %s73
      %p80 = scmp.eq.s32.totalorder %s21, 1
      %p81 = por %p79, %p80
      %p82 = scmp.ne.s32.totalorder %s73, %s74
      %p83 = scmp.eq.s32.totalorder %s21, 0
      %p84 = por %p82, %p83
      %p85 = scmp.ne.s32.totalorder %s73, %s74
      %p86 = scmp.eq.s32.totalorder %s22, 1
      %p87 = por %p85, %p86
      %p89 = scmp.ne.s32.totalorder %s74, %s88
      %p90 = scmp.eq.s32.totalorder %s22, 0
      %p91 = por %p89, %p90
      %s92 = ssub.s32 %s16, %s23
      %p93 = scmp.eq.s32.totalorder %s92, 0
      %s95 = sadd.s32 %s94, 1
      %s96 = scalar_select %p93, %s94, %s95
      %p99 = pneg %p93
      %p100 = scmp.eq.s32.totalorder %s16, 1
      %p101 = por %p99, %p100
      %p102 = scmp.ne.s32.totalorder %s94, %s97
      %p103 = scmp.eq.s32.totalorder %s16, 0
      %p104 = por %p102, %p103
      %p105 = scmp.ne.s32.totalorder %s94, %s97
      %p106 = scmp.eq.s32.totalorder %s21, 1
      %p107 = por %p105, %p106
      %p108 = scmp.ne.s32.totalorder %s97, %s98
      %p109 = scmp.eq.s32.totalorder %s21, 0
      %p110 = por %p108, %p109
      %p111 = scmp.ne.s32.totalorder %s97, %s98
      %p112 = scmp.eq.s32.totalorder %s22, 1
      %p113 = por %p111, %p112
      %p115 = scmp.ne.s32.totalorder %s98, %s114
      %p116 = scmp.eq.s32.totalorder %s22, 0
      %p117 = por %p115, %p116
      %p118 = scmp.le.s32.totalorder 1, %s16
      %p119 = scmp.lt.s32.totalorder %s16, 3
      %p120 = pnand %p118, %p119
      %p121 = pneg %p120
      // Predicated region
      $region9: #{tpu_custom_call.1} parent=5 // pred_check
        _
      $region10: #{tpu_custom_call.1} parent=5 // pred_check_branch
        %123 = sbr.rel (%p120) target = $region12
      $region11: #{tpu_custom_call.1} parent=5 // pred_region
        %s124 = ssub.s32 %s16, 1
        // Predicated region
        $region13: #{tpu_custom_call.1} parent=11 // pred_check
          %p125 = pneg %p63
        $region14: #{tpu_custom_call.1} parent=11 // pred_check_branch
          %127 = sbr.rel (%p125) target = $region16
        $region15: #{tpu_custom_call.1} parent=11 // pred_region
          %s129 = ssub.s32 4096, 4096
          %130 = vsyncadd [#allocation6], %s129
          %s131 = sshll.u32 [#allocation5], 4
          %s132 = int_to_ptr.vmem [resolvable:$true] %s131
          %137 = dma.hbm_to_vmem [thread:$0]  %s1, 4096, %s132, [#allocation6], 128, 128, 8
        $region16: #{tpu_custom_call.1} parent=11 // pred_fallthru
          _
        // Predicated region
        $region17: #{tpu_custom_call.1} parent=11 // pred_check
          %p138 = pneg %p84
        $region18: #{tpu_custom_call.1} parent=11 // pred_check_branch
          %140 = sbr.rel (%p138) target = $region20
        $region19: #{tpu_custom_call.1} parent=11 // pred_region
          _
        $region20: #{tpu_custom_call.1} parent=11 // pred_fallthru
          _
      $region12: #{tpu_custom_call.1} parent=5 // pred_fallthru
        _
      %p141 = scmp.lt.s32.totalorder %s16, 2
      // Predicated region
      $region21: #{tpu_custom_call.1} parent=5 // pred_check
        %p142 = pneg %p141
      $region22: #{tpu_custom_call.1} parent=5 // pred_check_branch
        %144 = sbr.rel (%p142) target = $region24
      $region23: #{tpu_custom_call.1} parent=5 // pred_region
        // Predicated region
        $region25: #{tpu_custom_call.1} parent=23 // pred_check
          %p145 = pneg %p36
        $region26: #{tpu_custom_call.1} parent=23 // pred_check_branch
          %147 = sbr.rel (%p145) target = $region28
        $region27: #{tpu_custom_call.1} parent=23 // pred_region
          %s148 = sand.u32 %s26, 1
          %s149 = scalar_lea.sflag [#allocation3], %s148
          %s150 = sand.u32 %s26, 1
          %s151 = smul.addr %s150, 256
          %s152 = scalar_lea.vmem [#allocation2], %s151
          %s153 = smul.u32 16, %s16
          %s155 = ssub.s32 4096, 4096
          %156 = vsyncadd %s149, %s155
          %s157 = smul.addr %s153, 2
          %s158 = smul.addr %s157, 128
          %s159 = scalar_lea.hbm %s0, %s158
          %s160 = sshll.u32 %s152, 4
          %s161 = int_to_ptr.vmem [resolvable:$true] %s160
          %166 = dma.hbm_to_vmem [thread:$0]  %s159, 4096, %s161, %s149, 256, 256, 16
        $region28: #{tpu_custom_call.1} parent=23 // pred_fallthru
          _
      $region24: #{tpu_custom_call.1} parent=5 // pred_fallthru
        _
      %p167 = scmp.le.s32.totalorder 1, %s16
      %p168 = scmp.lt.s32.totalorder %s16, 3
      %p169 = pnand %p167, %p168
      %p170 = pneg %p169
      // Predicated region
      $region29: #{tpu_custom_call.1} parent=5 // pred_check
        _
      $region30: #{tpu_custom_call.1} parent=5 // pred_check_branch
        %172 = sbr.rel (%p169) target = $region32
      $region31: #{tpu_custom_call.1} parent=5 // pred_region
        %s173 = ssub.s32 %s16, 1
        %s174 = sand.u32 %s29, 1
        %s175 = scalar_lea.sflag [#allocation3], %s174
        %s176 = sand.u32 %s29, 1
        %s177 = smul.addr %s176, 256
        %s178 = scalar_lea.vmem [#allocation2], %s177
        // Predicated region
        $region33: #{tpu_custom_call.1} parent=31 // pred_check
          %p179 = pneg %p42
        $region34: #{tpu_custom_call.1} parent=31 // pred_check_branch
          %181 = sbr.rel (%p179) target = $region36
        $region35: #{tpu_custom_call.1} parent=31 // pred_region
          %182 = dma.done %s175, 4096
        $region36: #{tpu_custom_call.1} parent=31 // pred_fallthru
          _
        // Predicated region
        $region37: #{tpu_custom_call.1} parent=31 // pred_check
          %p183 = pneg %p63
        $region38: #{tpu_custom_call.1} parent=31 // pred_check_branch
          %185 = sbr.rel (%p183) target = $region40
        $region39: #{tpu_custom_call.1} parent=31 // pred_region
          %186 = dma.done [#allocation6], 4096
        $region40: #{tpu_custom_call.1} parent=31 // pred_fallthru
          _
        %s187 = sand.u32 %s29, 1
        %s188 = scalar_lea.sflag [#allocation3], %s187
        %s189 = sand.u32 %s29, 1
        %s190 = smul.addr %s189, 256
        %s191 = scalar_lea.vmem [#allocation2], %s190
        %p192 = pneg %p42
        %p193 = pneg %p39
        %p194 = pneg %p63
        %p195 = pneg %p60
        %p196 = pneg %p84
        %p197 = pneg %p81
        %p198 = pneg %p110
        %p199 = pneg %p107
        %s200 = sand.u32 %s97, 1
        %s201 = scalar_lea.sflag [#allocation4], %s200
        %s202 = sand.u32 %s97, 1
        %s203 = smul.addr %s202, 128
        %s204 = scalar_lea.vmem [#allocation7], %s203
        %s205 = smul.u32 16, %s21
        %s206 = smul.u32 16, %s21
        %v207 = vld [vmem:[%s178] sm:$0xff]
        %v208 = vld [vmem:[%s178 + $0x8] sm:$0xff]
        %v209 = vld [vmem:[%s178 + $0x10] sm:$0xff]
        %v210 = vld [vmem:[%s178 + $0x18] sm:$0xff]
        %v211 = vld [vmem:[%s178 + $0x20] sm:$0xff]
        %v212 = vld [vmem:[%s178 + $0x28] sm:$0xff]
        %v213 = vld [vmem:[%s178 + $0x30] sm:$0xff]
        %v214 = vld [vmem:[%s178 + $0x38] sm:$0xff]
        %v215 = vld [vmem:[%s178 + $0x40] sm:$0xff]
        %v216 = vld [vmem:[%s178 + $0x48] sm:$0xff]
        %v217 = vld [vmem:[%s178 + $0x50] sm:$0xff]
        %v218 = vld [vmem:[%s178 + $0x58] sm:$0xff]
        %v219 = vld [vmem:[%s178 + $0x60] sm:$0xff]
        %v220 = vld [vmem:[%s178 + $0x68] sm:$0xff]
        %v221 = vld [vmem:[%s178 + $0x70] sm:$0xff]
        %v222 = vld [vmem:[%s178 + $0x78] sm:$0xff]
        %v223 = vld [vmem:[%s178 + $0x80] sm:$0xff]
        %v224 = vld [vmem:[%s178 + $0x88] sm:$0xff]
        %v225 = vld [vmem:[%s178 + $0x90] sm:$0xff]
        %v226 = vld [vmem:[%s178 + $0x98] sm:$0xff]
        %v227 = vld [vmem:[%s178 + $0xa0] sm:$0xff]
        %v228 = vld [vmem:[%s178 + $0xa8] sm:$0xff]
        %v229 = vld [vmem:[%s178 + $0xb0] sm:$0xff]
        %v230 = vld [vmem:[%s178 + $0xb8] sm:$0xff]
        %v231 = vld [vmem:[%s178 + $0xc0] sm:$0xff]
        %v232 = vld [vmem:[%s178 + $0xc8] sm:$0xff]
        %v233 = vld [vmem:[%s178 + $0xd0] sm:$0xff]
        %v234 = vld [vmem:[%s178 + $0xd8] sm:$0xff]
        %v235 = vld [vmem:[%s178 + $0xe0] sm:$0xff]
        %v236 = vld [vmem:[%s178 + $0xe8] sm:$0xff]
        %v237 = vld [vmem:[%s178 + $0xf0] sm:$0xff]
        %v238 = vld [vmem:[%s178 + $0xf8] sm:$0xff]
        %v239 = vld [vmem:[#allocation5] sm:$0xff]
        %v240 = vld [vmem:[#allocation5 + $0x8] sm:$0xff]
        %v241 = vld [vmem:[#allocation5 + $0x10] sm:$0xff]
        %v242 = vld [vmem:[#allocation5 + $0x18] sm:$0xff]
        %v243 = vld [vmem:[#allocation5 + $0x20] sm:$0xff]
        %v244 = vld [vmem:[#allocation5 + $0x28] sm:$0xff]
        %v245 = vld [vmem:[#allocation5 + $0x30] sm:$0xff]
        %v246 = vld [vmem:[#allocation5 + $0x38] sm:$0xff]
        %v247 = vld [vmem:[#allocation5 + $0x40] sm:$0xff]
        %v248 = vld [vmem:[#allocation5 + $0x48] sm:$0xff]
        %v249 = vld [vmem:[#allocation5 + $0x50] sm:$0xff]
        %v250 = vld [vmem:[#allocation5 + $0x58] sm:$0xff]
        %v251 = vld [vmem:[#allocation5 + $0x60] sm:$0xff]
        %v252 = vld [vmem:[#allocation5 + $0x68] sm:$0xff]
        %v253 = vld [vmem:[#allocation5 + $0x70] sm:$0xff]
        %v254 = vld [vmem:[#allocation5 + $0x78] sm:$0xff]
        %v255 = vld [vmem:[#allocation5 + $0x80] sm:$0xff]
        %v256 = vld [vmem:[#allocation5 + $0x88] sm:$0xff]
        %v257 = vld [vmem:[#allocation5 + $0x90] sm:$0xff]
        %v258 = vld [vmem:[#allocation5 + $0x98] sm:$0xff]
        %v259 = vld [vmem:[#allocation5 + $0xa0] sm:$0xff]
        %v260 = vld [vmem:[#allocation5 + $0xa8] sm:$0xff]
        %v261 = vld [vmem:[#allocation5 + $0xb0] sm:$0xff]
        %v262 = vld [vmem:[#allocation5 + $0xb8] sm:$0xff]
        %v263 = vld [vmem:[#allocation5 + $0xc0] sm:$0xff]
        %v264 = vld [vmem:[#allocation5 + $0xc8] sm:$0xff]
        %v265 = vld [vmem:[#allocation5 + $0xd0] sm:$0xff]
        %v266 = vld [vmem:[#allocation5 + $0xd8] sm:$0xff]
        %v267 = vld [vmem:[#allocation5 + $0xe0] sm:$0xff]
        %v268 = vld [vmem:[#allocation5 + $0xe8] sm:$0xff]
        %v269 = vld [vmem:[#allocation5 + $0xf0] sm:$0xff]
        %v270 = vld [vmem:[#allocation5 + $0xf8] sm:$0xff]
        %v271 = vld [vmem:[%s2] sm:$0x1]
        %v273 = vlaneseq
        %v274 = vshrl.u32 %v273, 7
        %v275 = vsub.s32 0, %v274
        %v276 = vrot.slane %v271, %v275
        %278 = vmatprep.subr.mxu0 0.0
        %279 = vmatpush1.msra.mxu0 %v254
        %280 = vmatprep.subr.mxu0 0.0
        %281 = vmatpush1.msra.mxu0 %v253
        %282 = vmatprep.subr.mxu0 0.0
        %283 = vmatpush1.msra.mxu0 %v252
        %284 = vmatprep.subr.mxu0 0.0
        %285 = vmatpush1.msra.mxu0 %v251
        %286 = vmatprep.subr.mxu0 0.0
        %287 = vmatpush1.msra.mxu0 %v250
        %288 = vmatprep.subr.mxu0 0.0
        %289 = vmatpush1.msra.mxu0 %v249
        %290 = vmatprep.subr.mxu0 0.0
        %291 = vmatpush1.msra.mxu0 %v248
        %292 = vmatprep.subr.mxu0 0.0
        %293 = vmatpush1.msra.mxu0 %v247
        %294 = vmatprep.subr.mxu0 0.0
        %295 = vmatpush1.msra.mxu0 %v246
        %296 = vmatprep.subr.mxu0 0.0
        %297 = vmatpush1.msra.mxu0 %v245
        %298 = vmatprep.subr.mxu0 0.0
        %299 = vmatpush1.msra.mxu0 %v244
        %300 = vmatprep.subr.mxu0 0.0
        %301 = vmatpush1.msra.mxu0 %v243
        %302 = vmatprep.subr.mxu0 0.0
        %303 = vmatpush1.msra.mxu0 %v242
        %304 = vmatprep.subr.mxu0 0.0
        %305 = vmatpush1.msra.mxu0 %v241
        %306 = vmatprep.subr.mxu0 0.0
        %307 = vmatpush1.msra.mxu0 %v240
        %308 = vmatprep.subr.mxu0 0.0
        %309 = vmatpush1.msra.mxu0 %v239
        %310 = vmatprep.subr.mxu0 0.0
        %311 = vmatpush2.msra.mxu0 %v270
        %312 = vmatprep.subr.mxu0 0.0
        %313 = vmatpush2.msra.mxu0 %v269
        %314 = vmatprep.subr.mxu0 0.0
        %315 = vmatpush2.msra.mxu0 %v268
        %316 = vmatprep.subr.mxu0 0.0
        %317 = vmatpush2.msra.mxu0 %v267
        %318 = vmatprep.subr.mxu0 0.0
        %319 = vmatpush2.msra.mxu0 %v266
        %320 = vmatprep.subr.mxu0 0.0
        %321 = vmatpush2.msra.mxu0 %v265
        %322 = vmatprep.subr.mxu0 0.0
        %323 = vmatpush2.msra.mxu0 %v264
        %324 = vmatprep.subr.mxu0 0.0
        %325 = vmatpush2.msra.mxu0 %v263
        %326 = vmatprep.subr.mxu0 0.0
        %327 = vmatpush2.msra.mxu0 %v262
        %328 = vmatprep.subr.mxu0 0.0
        %329 = vmatpush2.msra.mxu0 %v261
        %330 = vmatprep.subr.mxu0 0.0
        %331 = vmatpush2.msra.mxu0 %v260
        %332 = vmatprep.subr.mxu0 0.0
        %333 = vmatpush2.msra.mxu0 %v259
        %334 = vmatprep.subr.mxu0 0.0
        %335 = vmatpush2.msra.mxu0 %v258
        %336 = vmatprep.subr.mxu0 0.0
        %337 = vmatpush2.msra.mxu0 %v257
        %338 = vmatprep.subr.mxu0 0.0
        %339 = vmatpush2.msra.mxu0 %v256
        %340 = vmatprep.subr.mxu0 0.0
        %341 = vmatpush2.msra.mxu0 %v255
        %342 = vmatprep.mubr.f32.mxu0 %v208
        %343 = vmatmul.mubr.f32.gmra.mxu0 %v207
        %v344 = vpop.f32.mrf.mxu0
        %v345 = vadd.f32 %v276, %v344
        %v346 = vpop.f32.mrf.mxu0
        %347 = vmatprep.mubr.f32.mxu0 %v210
        %348 = vmatmul.mubr.f32.gmra.mxu0 %v209
        %v349 = vpop.f32.mrf.mxu0
        %v350 = vadd.f32 %v276, %v349
        %v351 = vpop.f32.mrf.mxu0
        %352 = vmatprep.mubr.f32.mxu0 %v212
        %353 = vmatmul.mubr.f32.gmra.mxu0 %v211
        %v354 = vpop.f32.mrf.mxu0
        %v355 = vadd.f32 %v276, %v354
        %v356 = vpop.f32.mrf.mxu0
        %357 = vmatprep.mubr.f32.mxu0 %v214
        %358 = vmatmul.mubr.f32.gmra.mxu0 %v213
        %v359 = vpop.f32.mrf.mxu0
        %v360 = vadd.f32 %v276, %v359
        %v361 = vpop.f32.mrf.mxu0
        %362 = vmatprep.mubr.f32.mxu0 %v216
        %363 = vmatmul.mubr.f32.gmra.mxu0 %v215
        %v364 = vpop.f32.mrf.mxu0
        %v365 = vadd.f32 %v276, %v364
        %v366 = vpop.f32.mrf.mxu0
        %367 = vmatprep.mubr.f32.mxu0 %v218
        %368 = vmatmul.mubr.f32.gmra.mxu0 %v217
        %v369 = vpop.f32.mrf.mxu0
        %v370 = vadd.f32 %v276, %v369
        %v371 = vpop.f32.mrf.mxu0
        %372 = vmatprep.mubr.f32.mxu0 %v220
        %373 = vmatmul.mubr.f32.gmra.mxu0 %v219
        %v374 = vpop.f32.mrf.mxu0
        %v375 = vadd.f32 %v276, %v374
        %v376 = vpop.f32.mrf.mxu0
        %377 = vmatprep.mubr.f32.mxu0 %v222
        %378 = vmatmul.mubr.f32.gmra.mxu0 %v221
        %v379 = vpop.f32.mrf.mxu0
        %v380 = vadd.f32 %v276, %v379
        %v381 = vpop.f32.mrf.mxu0
        %382 = vmatprep.mubr.f32.mxu0 %v224
        %383 = vmatmul.mubr.f32.gmra.mxu0 %v223
        %v384 = vpop.f32.mrf.mxu0
        %v385 = vadd.f32 %v276, %v384
        %v386 = vpop.f32.mrf.mxu0
        %387 = vmatprep.mubr.f32.mxu0 %v226
        %388 = vmatmul.mubr.f32.gmra.mxu0 %v225
        %v389 = vpop.f32.mrf.mxu0
        %v390 = vadd.f32 %v276, %v389
        %v391 = vpop.f32.mrf.mxu0
        %392 = vmatprep.mubr.f32.mxu0 %v228
        %393 = vmatmul.mubr.f32.gmra.mxu0 %v227
        %v394 = vpop.f32.mrf.mxu0
        %v395 = vadd.f32 %v276, %v394
        %v396 = vpop.f32.mrf.mxu0
        %397 = vmatprep.mubr.f32.mxu0 %v230
        %398 = vmatmul.mubr.f32.gmra.mxu0 %v229
        %v399 = vpop.f32.mrf.mxu0
        %v400 = vadd.f32 %v276, %v399
        %v401 = vpop.f32.mrf.mxu0
        %402 = vmatprep.mubr.f32.mxu0 %v232
        %403 = vmatmul.mubr.f32.gmra.mxu0 %v231
        %v404 = vpop.f32.mrf.mxu0
        %v405 = vadd.f32 %v276, %v404
        %v406 = vpop.f32.mrf.mxu0
        %407 = vmatprep.mubr.f32.mxu0 %v234
        %408 = vmatmul.mubr.f32.gmra.mxu0 %v233
        %v409 = vpop.f32.mrf.mxu0
        %v410 = vadd.f32 %v276, %v409
        %v411 = vpop.f32.mrf.mxu0
        %412 = vmatprep.mubr.f32.mxu0 %v236
        %413 = vmatmul.mubr.f32.gmra.mxu0 %v235
        %v414 = vpop.f32.mrf.mxu0
        %v415 = vadd.f32 %v276, %v414
        %v416 = vpop.f32.mrf.mxu0
        %417 = vmatprep.mubr.f32.mxu0 %v238
        %418 = vmatmul.mubr.f32.gmra.mxu0 %v237
        %v419 = vpop.f32.mrf.mxu0
        %v420 = vadd.f32 %v276, %v419
        %v421 = vpop.f32.mrf.mxu0
        %422 = vdwg.mxu0
        %423 = vst [vmem:[%s204] sm:$0xff] %v345
        %424 = vst [vmem:[%s204 + $0x8] sm:$0xff] %v350
        %425 = vst [vmem:[%s204 + $0x10] sm:$0xff] %v355
        %426 = vst [vmem:[%s204 + $0x18] sm:$0xff] %v360
        %427 = vst [vmem:[%s204 + $0x20] sm:$0xff] %v365
        %428 = vst [vmem:[%s204 + $0x28] sm:$0xff] %v370
        %429 = vst [vmem:[%s204 + $0x30] sm:$0xff] %v375
        %430 = vst [vmem:[%s204 + $0x38] sm:$0xff] %v380
        %431 = vst [vmem:[%s204 + $0x40] sm:$0xff] %v385
        %432 = vst [vmem:[%s204 + $0x48] sm:$0xff] %v390
        %433 = vst [vmem:[%s204 + $0x50] sm:$0xff] %v395
        %434 = vst [vmem:[%s204 + $0x58] sm:$0xff] %v400
        %435 = vst [vmem:[%s204 + $0x60] sm:$0xff] %v405
        %436 = vst [vmem:[%s204 + $0x68] sm:$0xff] %v410
        %437 = vst [vmem:[%s204 + $0x70] sm:$0xff] %v415
        %438 = vst [vmem:[%s204 + $0x78] sm:$0xff] %v420
        %s439 = sand.u32 %s97, 1
        %s440 = scalar_lea.sflag [#allocation4], %s439
        %s441 = sand.u32 %s97, 1
        %s442 = smul.addr %s441, 128
        %s443 = scalar_lea.vmem [#allocation7], %s442
        // Predicated region
        $region41: #{tpu_custom_call.1} parent=31 // pred_check
          %p444 = pneg %p107
        $region42: #{tpu_custom_call.1} parent=31 // pred_check_branch
          %446 = sbr.rel (%p444) target = $region44
        $region43: #{tpu_custom_call.1} parent=31 // pred_region
          %s447 = smul.u32 16, %s21
          %s449 = ssub.s32 2048, 2048
          %450 = vsyncadd %s440, %s449
          %s451 = smul.addr %s447, 128
          %s452 = scalar_lea.hbm %s3, %s451
          %s453 = sshll.u32 %s443, 4
          %s454 = int_to_ptr.vmem [resolvable:$true] %s453
          %459 = dma.vmem_to_hbm [thread:$0]  %s454, 2048, %s452, %s440, 128, 128, 8
        $region44: #{tpu_custom_call.1} parent=31 // pred_fallthru
          _
      $region32: #{tpu_custom_call.1} parent=5 // pred_fallthru
        _
      %p460 = scmp.le.s32.totalorder 2, %s16
      // Predicated region
      $region45: #{tpu_custom_call.1} parent=5 // pred_check
        %p461 = pneg %p460
      $region46: #{tpu_custom_call.1} parent=5 // pred_check_branch
        %463 = sbr.rel (%p461) target = $region48
      $region47: #{tpu_custom_call.1} parent=5 // pred_region
        %s464 = ssub.s32 %s16, 2
        // Predicated region
        $region49: #{tpu_custom_call.1} parent=47 // pred_check
          %p465 = pneg %p113
        $region50: #{tpu_custom_call.1} parent=47 // pred_check_branch
          %467 = sbr.rel (%p465) target = $region52
        $region51: #{tpu_custom_call.1} parent=47 // pred_region
          %s468 = sand.u32 %s98, 1
          %s469 = scalar_lea.sflag [#allocation4], %s468
          %s470 = sand.u32 %s98, 1
          %s471 = smul.addr %s470, 128
          %s472 = scalar_lea.vmem [#allocation7], %s471
          %473 = dma.done %s469, 2048
        $region52: #{tpu_custom_call.1} parent=47 // pred_fallthru
          _
      $region48: #{tpu_custom_call.1} parent=5 // pred_fallthru
        _
    $region6: #{tpu_custom_call.1} parent=1 // loop_footer
      %s20 = sadd.s32 1, %s16
    $region7: #{tpu_custom_call.1} parent=1 // loop_footer_branch
      %15 = sbr.rel target = $region3
    $region8: #{tpu_custom_call.1} parent=1 // loop_exit
      _
    %474 = vsyncpa [#allocation3], 1
    %s475 = scalar_lea.sflag [#allocation3], 1
    %476 = vsyncpa %s475, 1
    %477 = vsyncpa [#allocation6], 1
    %478 = vsyncpa [#allocation4], 1
    %s479 = scalar_lea.sflag [#allocation4], 1
    %480 = vsyncpa %s479, 1

</llo_original>
